<compile_context>
chip_gen: v7x
topology: tpu7x:2x2x1
jax: 0.10.0
libtpu: 0.0.40
codegen_flags: <defaults>
</compile_context>

<pallas_src>
import math

import jax
import jax.numpy as jnp
from jax.experimental import pallas as pl
from jax.experimental.pallas import tpu as pltpu


def make_positional_encoding(seq_len: int, d_model: int) -> jnp.ndarray:
    """Deterministic sinusoidal PE buffer, identical to the torch __init__."""
    if d_model % 2 != 0:
        raise ValueError(
            f"d_model must be even for the interleaved sin/cos PE (got {d_model})."
        )
    position = jnp.arange(seq_len, dtype=jnp.float32)[:, None]          # (S, 1)
    div_term = jnp.exp(
        jnp.arange(0, d_model, 2, dtype=jnp.float32)
        * -(math.log(10000.0) / d_model)
    )                                                                    # (D/2,)
    angles = position * div_term                                         # (S, D/2)
    pe = jnp.zeros((seq_len, d_model), dtype=jnp.float32)
    pe = pe.at[:, 0::2].set(jnp.sin(angles))
    pe = pe.at[:, 1::2].set(jnp.cos(angles))
    return pe


def _pos_enc_kernel(x_ref, pe_ref, o_ref):
    # x_ref / o_ref: (tb, tn) tile of the flattened (B, S*D) array.
    # pe_ref:        (1, tn) tile of the flattened (1, S*D) table (sublane broadcast).
    o_ref[...] = x_ref[...] + pe_ref[...]


def _choose_tiles(b: int, n: int, itemsize: int,
                  max_block_bytes: int = 4 * 1024 * 1024):
    """Pick (tb, tn) block dims: lane-dense, dividing (b, n), <= ~max_block_bytes."""
    if b * n * itemsize <= max_block_bytes:
        return b, n                                   # whole thing is one small block
    # Batch tile: full batch, or 8 rows when batch is a clean multiple of 8.
    tb = 8 if (b > 8 and b % 8 == 0) else b
    # Lane tile: largest multiple of 128 that divides n and fits the byte budget.
    if n % 128 != 0:
        return tb, n                                  # full (legal) lane extent
    max_tn = max(128, (max_block_bytes // (tb * itemsize)) // 128 * 128)
    tn = 128
    t = min(max_tn, n)
    while t >= 128:
        if n % t == 0:
            tn = t
            break
        t -= 128
    return tb, tn


def positional_encoder_forward(x: jnp.ndarray, pe: jnp.ndarray,
                               *, use_pallas: bool | None = None) -> jnp.ndarray:
    """x: (B, S, D); pe: (S_max, D) with S_max >= S. Returns x + pe[:S] (broadcast)."""
    b, s, d = x.shape
    if s > pe.shape[0]:
        raise ValueError(
            f"runtime seq_len={s} exceeds the PE buffer's max seq_len={pe.shape[0]}"
        )
    if d != pe.shape[1]:
        raise ValueError(f"d_model mismatch: x has {d}, pe has {pe.shape[1]}")

    pe_slice = pe[:s, :].astype(x.dtype)              # mirrors self.pe[:seq_len, :]
    n = s * d
    itemsize = jnp.dtype(x.dtype).itemsize

    if use_pallas is None:
        # Tiny inputs: fixed Pallas call overhead exceeds the work; plain add wins.
        use_pallas = b * n >= (1 << 20)
    if not use_pallas:
        return x + pe_slice[None, :, :]

    # Lane-dense flattened layout (contiguous reshapes are free).
    x2 = x.reshape(b, n)
    pe2 = pe_slice.reshape(1, n)

    tb, tn = _choose_tiles(b, n, itemsize)
    grid = (n // tn, b // tb)                         # batch axis innermost (fastest)

    out2 = pl.pallas_call(
        _pos_enc_kernel,
        out_shape=jax.ShapeDtypeStruct((b, n), x.dtype),
        grid_spec=pltpu.PrefetchScalarGridSpec(
            num_scalar_prefetch=0,
            grid=grid,
            in_specs=[
                pl.BlockSpec((tb, tn), lambda ni, bi: (bi, ni)),
                # pe block index depends only on the outer axis -> same block across
                # the inner batch loop, so its DMA is not re-issued per batch step.
                pl.BlockSpec((1, tn), lambda ni, bi: (0, ni)),
            ],
            out_specs=pl.BlockSpec((tb, tn), lambda ni, bi: (bi, ni)),
        ),
        compiler_params=pltpu.CompilerParams(
            dimension_semantics=("parallel", "parallel"),
            vmem_limit_bytes=32 * 1024 * 1024,
        ),
        cost_estimate=pl.CostEstimate(
            flops=b * n,
            transcendentals=0,
            bytes_accessed=2 * b * n * itemsize + n * itemsize,
        ),
    )(x2, pe2)

    return out2.reshape(b, s, d)


if __name__ == "__main__":
    batch, seq_len, d_model = 2, 8, 32
    max_seq_len = 16  # module's seq_len (>= runtime seq_len), like the torch buffer

    key = jax.random.PRNGKey(0)
    x = jax.random.normal(key, (batch, seq_len, d_model), dtype=jnp.float32)

    pe = make_positional_encoding(max_seq_len, d_model)

    # Force the Pallas path even at this toy shape so the kernel itself is exercised.
    out = positional_encoder_forward(x, pe, use_pallas=True)
    out = jax.block_until_ready(out)

    # Reference check against plain-JAX semantics of the torch forward.
    ref = x + pe[:seq_len, :][None, :, :]
    assert out.shape == x.shape
    assert jnp.allclose(out, ref, atol=1e-6), "mismatch vs reference"

    print("KERNEL_OK")
</pallas_src>

<mosaic_0001>
module attributes {stable_mosaic.version = 11 : i64} {
  func.func @_pos_enc_kernel(%arg0: i32, %arg1: i32, %arg2: memref<2x256xf32, #tpu.memory_space<vmem>>, %arg3: memref<1x256xf32, #tpu.memory_space<vmem>>, %arg4: memref<2x256xf32, #tpu.memory_space<vmem>>) attributes {dimension_semantics = [#tpu.dimension_semantics<parallel>, #tpu.dimension_semantics<parallel>], iteration_bounds = array<i64: 1, 1>, scalar_prefetch = 0 : i64, scratch_operands = 0 : i64, tpu.core_type = #tpu.core_type<tc>, window_params = [{transform_indices = @transform_0, window_bounds = array<i64: 2, 256>}, {transform_indices = @transform_1, window_bounds = array<i64: 1, 256>}, {transform_indices = @transform_2, window_bounds = array<i64: 2, 256>}]} {
    %c0 = arith.constant 0 : index
    %c0_0 = arith.constant 0 : index
    %0 = vector.load %arg2[%c0, %c0_0] : memref<2x256xf32, #tpu.memory_space<vmem>>, vector<2x256xf32>
    %c0_1 = arith.constant 0 : index
    %c0_2 = arith.constant 0 : index
    %1 = vector.load %arg3[%c0_1, %c0_2] : memref<1x256xf32, #tpu.memory_space<vmem>>, vector<1x256xf32>
    %2 = vector.broadcast %1 : vector<1x256xf32> to vector<2x256xf32>
    %3 = arith.addf %0, %2 : vector<2x256xf32>
    %c0_3 = arith.constant 0 : index
    %c0_4 = arith.constant 0 : index
    %4 = vector.load %arg4[%c0_3, %c0_4] : memref<2x256xf32, #tpu.memory_space<vmem>>, vector<2x256xf32>
    tpu.vector_store %arg4[%c0_3, %c0_4], %3 {strides = array<i32>} : memref<2x256xf32, #tpu.memory_space<vmem>>, vector<2x256xf32>,
    return
  }
  func.func @transform_0(%arg0: i32, %arg1: i32) -> (i32, i32) {
    %c0_i32 = arith.constant 0 : i32
    return %arg1, %arg0 : i32, i32
  }
  func.func @transform_1(%arg0: i32, %arg1: i32) -> (i32, i32) {
    %c0_i32 = arith.constant 0 : i32
    %c0_i32_0 = arith.constant 0 : i32
    return %c0_i32, %arg0 : i32, i32
  }
  func.func @transform_2(%arg0: i32, %arg1: i32) -> (i32, i32) {
    %c0_i32 = arith.constant 0 : i32
    return %arg1, %arg0 : i32, i32
  }
}

</mosaic_0001>

<llo_original>
// kernel: tpu_custom_call.1
$region0: #{tpu_custom_call.1}
  #allocation0 [shape = 'u32[]', space=smem, size = 0x4, offset = 0x4, fixed_abs, tag = 'smem constant byte address 0x4 - core index']
  #allocation1 [shape = 'u32[144,128]{1,0:T(1,128)}', space=vmem, size = 0x12000, scoped, tag = 'internal scratch']
  %s0 = inlined_call_operand.hbm [shape: f32[2,256], index: 0, kind: input, shape index: {}]
  %s1 = inlined_call_operand.vmem [shape: f32[1,256], index: 1, kind: input, shape index: {}]
  %s2 = inlined_call_operand.hbm [shape: f32[2,256], index: 2, kind: output, shape index: {}]
  %s3 = sld [smem:[#allocation0]]
  $region22: #{tpu_custom_call.1} parent=0
    _
  %s5 = ssub.s32 1, %s3
  %s6 = scalar_select 0, %s5, %s3
  $region1: #{tpu_custom_call.1} parent=0
    #allocation2 [shape = 'u8[2048]{0}', space=vmem, size = 0x800, scoped, tag = 'input window, operand 0, single buffered']
    #allocation3 [shape = 's32[1]{0}', space=sflag, size = 0x4, scoped, tag = 'scoped memory for tpu_custom_call.1']
    #allocation4 [shape = 's32[1]{0}', space=sflag, size = 0x4, scoped, tag = 'scoped memory for tpu_custom_call.1']
    #allocation5 [shape = 'u8[2048]{0}', space=vmem, size = 0x800, scoped, tag = 'output window, operand 0, single buffered']
    %7 = vsyncpa [#allocation3], 0
    %8 = vsyncpa [#allocation4], 0
    // Predicated region
    $region2: #{tpu_custom_call.1} parent=1 // pred_check
      _
    $region3: #{tpu_custom_call.1} parent=1 // pred_check_branch
      %10 = sbr.rel (0) target = $region5
    $region4: #{tpu_custom_call.1} parent=1 // pred_region
      %s12 = ssub.s32 64, 64
      %13 = vsyncadd [#allocation3], %s12
      %s15 = sshll.u32 [#allocation2], 4
      %s16 = int_to_ptr.vmem [resolvable:$true] %s15
      %18 = dma.hbm_to_vmem [thread:$0]  %s0, 64, %s16, [#allocation3]
    $region5: #{tpu_custom_call.1} parent=1 // pred_fallthru
      _
    // Predicated region
    $region6: #{tpu_custom_call.1} parent=1 // pred_check
      _
    $region7: #{tpu_custom_call.1} parent=1 // pred_check_branch
      %20 = sbr.rel (0) target = $region9
    $region8: #{tpu_custom_call.1} parent=1 // pred_region
      _
    $region9: #{tpu_custom_call.1} parent=1 // pred_fallthru
      _
    // Predicated region
    $region10: #{tpu_custom_call.1} parent=1 // pred_check
      _
    $region11: #{tpu_custom_call.1} parent=1 // pred_check_branch
      %22 = sbr.rel (0) target = $region13
    $region12: #{tpu_custom_call.1} parent=1 // pred_region
      %23 = dma.done [#allocation3], 64
    $region13: #{tpu_custom_call.1} parent=1 // pred_fallthru
      _
    %v24 = vld [vmem:[#allocation2] sm:$0xf]
    %v25 = vld [vmem:[%s1] sm:$0x3]
    %v27 = vlaneseq
    %v28 = vshrl.u32 %v27, 7
    %v29 = vsub.s32 0, %v28
    %v30 = vrot.slane %v25, %v29
    %v31 = vlaneseq
    %v32 = vshrl.u32 %v31, 7
    %v33 = vsub.s32 1, %v32
    %v34 = vrot.slane %v25, %v33
    %v35 = vcombine.low %v30, %v34
    %v37 = vunpack.c.l.s4 1983009808
    %v38 = vunpack.c.0.s8 %v37
    %v39 = vlaneseq
    %v40 = vshrl.u32 %v39, 7
    %v41 = vsub.s32 %v38, %v40
    %v42 = vrot.slane %v35, %v41
    %v44 = vadd.f32 %v24, %v42
    %45 = vst [vmem:[#allocation5] sm:$0xf] %v44
    // Predicated region
    $region14: #{tpu_custom_call.1} parent=1 // pred_check
      _
    $region15: #{tpu_custom_call.1} parent=1 // pred_check_branch
      %47 = sbr.rel (0) target = $region17
    $region16: #{tpu_custom_call.1} parent=1 // pred_region
      %s49 = ssub.s32 64, 64
      %50 = vsyncadd [#allocation4], %s49
      %s52 = sshll.u32 [#allocation5], 4
      %s53 = int_to_ptr.vmem [resolvable:$true] %s52
      %55 = dma.vmem_to_hbm [thread:$0]  %s53, 64, %s2, [#allocation4]
    $region17: #{tpu_custom_call.1} parent=1 // pred_fallthru
      _
    // Predicated region
    $region18: #{tpu_custom_call.1} parent=1 // pred_check
      _
    $region19: #{tpu_custom_call.1} parent=1 // pred_check_branch
      %57 = sbr.rel (0) target = $region21
    $region20: #{tpu_custom_call.1} parent=1 // pred_region
      %58 = dma.done [#allocation4], 64
    $region21: #{tpu_custom_call.1} parent=1 // pred_fallthru
      _
    %59 = vsyncpa [#allocation3], 1
    %60 = vsyncpa [#allocation4], 1

</llo_original>
